<compile_context>
chip_gen: v7x
topology: tpu7x:2x2x1
jax: 0.10.0
libtpu: 0.0.40
codegen_flags: <defaults>
</compile_context>

<pallas_src>
import jax
import jax.numpy as jnp
from jax.experimental import pallas as pl
from jax.experimental.pallas import tpu as pltpu


def _round_up(n, m):
    return ((n + m - 1) // m) * m


def _folded_linear_kernel(x_ref, w_ref, o_ref):
    """out_tile = x_tile @ W_fold with an f32 MXU accumulator."""
    x = x_ref[...]
    w = w_ref[...]
    if x.dtype != w.dtype:
        # bf16 fast path: weights prepared in bf16, activations arrive f32.
        x = x.astype(w.dtype)
    o_ref[...] = jnp.dot(x, w, preferred_element_type=jnp.float32).astype(o_ref.dtype)


def prepare_params(weights, *, dtype=None):
    """One-time weight preparation (call once, NOT per forward pass).

    Folds the bias-free chain into a single linear map.

    Args:
      weights: list of PyTorch-convention weights, weights[i] has shape
               (out_features, in_features) i.e. (dims[i+1], dims[i]).
      dtype:   optional compute dtype for the folded weight (e.g. jnp.bfloat16
               to use the bf16-native MXU path on v6e/v7x).

    Returns a dict consumed by `linear_nn_forward`.

    Note: folding changes per-layer rounding order vs. PyTorch's layer-by-layer
    execution; differences are at f32/bf16 rounding level.
    """
    if not weights:
        raise ValueError("LinearNN needs at least one layer")
    weights = [jnp.asarray(w) for w in weights]
    dims = [int(weights[0].shape[1])] + [int(w.shape[0]) for w in weights]
    for i, w in enumerate(weights):
        if w.shape != (dims[i + 1], dims[i]):
            raise ValueError("inconsistent layer shapes")

    # Fold once, accurately (HIGHEST precision f32), off the hot path.
    w_fold = weights[0].astype(jnp.float32).T                      # (in, out)
    for w in weights[1:]:
        w_fold = jnp.dot(w_fold, w.astype(jnp.float32).T,
                         precision=jax.lax.Precision.HIGHEST)
    if dtype is not None:
        w_fold = w_fold.astype(dtype)

    return {"w_fold": w_fold, "dim_x": dims[0], "dim_y": dims[-1]}


def _vmem_limit_bytes(budget_bytes):
    """Generation-aware VMEM ceiling: 3/4 of physical VMEM, >= 32 MiB scoped."""
    try:
        physical = int(pltpu.get_tpu_info().vmem_capacity_bytes)
    except Exception:   # hardware query unavailable (e.g. interpret/mock) -> safe default
        physical = 64 * 1024 * 1024
    cap = (physical * 3) // 4          # headroom for double-buffers / compiler scratch
    want = max(32 * 1024 * 1024, (budget_bytes * 3) // 2)
    return int(min(cap, want))


def linear_nn_forward(x, params, *, tile_m=None):
    """Forward pass of LinearNN (single fused matmul against the folded weight).

    Args:
      x:       (..., dim_x) input (leading dims are flattened into the batch).
      params:  output of `prepare_params`.
      tile_m:  optional batch tile override (rounded to sublane alignment).

    Returns:
      (..., dim_y) output, same dtype as x.
    """
    w_fold = params["w_fold"]
    dim_x, dim_y = params["dim_x"], params["dim_y"]

    if x.shape[-1] != dim_x:
        raise ValueError("input feature dim does not match prepared weights")
    orig_shape = x.shape
    x2 = x.reshape(-1, dim_x) if x.ndim != 2 else x
    M = x2.shape[0]
    out_dtype = x2.dtype

    # Batch tiling: one big tile on single-TC chips; >1 grid step only appears
    # when each step still holds >= 512 rows (so v7x megacore splits only when
    # there is enough work to fill the 256-row MXU on each core).
    sub = 16 if x2.dtype == jnp.bfloat16 else 8
    if tile_m is None:
        tile_m = min(512, _round_up(max(M, 1), sub))
    tile_m = max(sub, _round_up(int(tile_m), sub))
    grid_m = pl.cdiv(M, tile_m)   # ragged last block: Pallas masks the OOB rows

    # Explicit VMEM budget (conservatively assume double-buffered operands).
    isz_x = jnp.dtype(x2.dtype).itemsize
    isz_o = jnp.dtype(out_dtype).itemsize
    w_bytes = 2 * int(w_fold.size) * w_fold.dtype.itemsize
    io_bytes = 2 * tile_m * (dim_x * isz_x + dim_y * isz_o)
    budget = w_bytes + io_bytes + tile_m * dim_y * 4     # + f32 accumulator tile
    vmem_limit = _vmem_limit_bytes(budget)
    # TODO(synk): if the folded weight alone ever exceeds the VMEM budget
    # (huge dim_x*dim_y, mainly a concern on v7x's 64 MiB), add a K/N grid axis
    # marked "arbitrary" streaming weight tiles through a double-buffered block.

    cost = pl.CostEstimate(
        flops=2 * M * dim_x * dim_y,
        transcendentals=0,
        bytes_accessed=int(x2.size * isz_x
                           + w_fold.size * w_fold.dtype.itemsize
                           + M * dim_y * isz_o),
    )

    out = pl.pallas_call(
        _folded_linear_kernel,
        out_shape=jax.ShapeDtypeStruct((M, dim_y), out_dtype),
        grid_spec=pltpu.PrefetchScalarGridSpec(
            num_scalar_prefetch=0,
            grid=(grid_m,),
            in_specs=[
                # x tile: last dim at full extent -> no per-call pad of x.
                pl.BlockSpec((tile_m, dim_x), lambda i: (i, 0)),
                # Folded weight: fully resident, block index never changes.
                pl.BlockSpec((dim_x, dim_y), lambda i: (0, 0)),
            ],
            out_specs=pl.BlockSpec((tile_m, dim_y), lambda i: (i, 0)),
        ),
        compiler_params=pltpu.CompilerParams(
            dimension_semantics=("parallel",),
            vmem_limit_bytes=vmem_limit,
        ),
        cost_estimate=cost,
    )(x2, w_fold)

    if x.ndim != 2:
        out = out.reshape(orig_shape[:-1] + (dim_y,))
    return out


def init_linear_nn_params(key, dim_x, dim_y, hidden_dims):
    """Deterministic init matching nn.Linear's default U(-1/sqrt(fan_in), +...).

    Returns PyTorch-convention weight list: weights[i] shape = (out, in).
    """
    dims = [dim_x] + list(hidden_dims) + [dim_y]
    weights = []
    for i in range(len(dims) - 1):
        key, sub = jax.random.split(key)
        bound = 1.0 / jnp.sqrt(dims[i])
        w = jax.random.uniform(sub, (dims[i + 1], dims[i]), dtype=jnp.float32,
                               minval=-bound, maxval=bound)
        weights.append(w)
    return weights


if __name__ == "__main__":
    # Small shapes consistent with the module's forward:
    # LinearNN(dim_x=32, dim_y=16, hidden_dims=[64, 128]), batch = 16.
    dim_x, dim_y = 32, 16
    hidden_dims = [64, 128]
    batch = 16

    key = jax.random.PRNGKey(0)
    key, kx = jax.random.split(key)
    x = jax.random.normal(kx, (batch, dim_x), dtype=jnp.float32)
    weights = init_linear_nn_params(key, dim_x, dim_y, hidden_dims)

    # One-time preparation (fold the chain), then the fused forward.
    params = prepare_params(weights)
    out = jax.block_until_ready(linear_nn_forward(x, params))

    # Pure-JAX layer-by-layer reference (same semantics as the PyTorch forward).
    ref = x
    for w in weights:
        ref = ref @ w.T

    assert out.shape == (batch, dim_y)
    assert out.dtype == x.dtype
    # Folding changes per-layer rounding order and f32 matmuls may use bf16 MXU
    # passes at default precision, so compare with a moderately loose tolerance.
    max_diff = float(jnp.max(jnp.abs(out - ref)))
    assert jnp.allclose(out, ref, atol=2e-2, rtol=2e-2), (
        f"mismatch vs reference: max abs diff {max_diff:.3e}")

    print("KERNEL_OK")
</pallas_src>

<mosaic_0001>
module attributes {stable_mosaic.version = 11 : i64} {
  func.func @_folded_linear_kernel(%arg0: i32, %arg1: memref<16x32xf32, #tpu.memory_space<vmem>>, %arg2: memref<32x16xf32, #tpu.memory_space<vmem>>, %arg3: memref<16x16xf32, #tpu.memory_space<vmem>>) attributes {dimension_semantics = [#tpu.dimension_semantics<parallel>], iteration_bounds = array<i64: 1>, scalar_prefetch = 0 : i64, scratch_operands = 0 : i64, tpu.core_type = #tpu.core_type<tc>, window_params = [{transform_indices = @transform_0, window_bounds = array<i64: 16, 32>}, {pipeline_mode = #tpu.pipeline_mode<synchronous>, transform_indices = @transform_1, window_bounds = array<i64: 32, 16>}, {transform_indices = @transform_2, window_bounds = array<i64: 16, 16>}]} {
    %c0 = arith.constant 0 : index
    %c0_0 = arith.constant 0 : index
    %0 = vector.load %arg1[%c0, %c0_0] : memref<16x32xf32, #tpu.memory_space<vmem>>, vector<16x32xf32>
    %c0_1 = arith.constant 0 : index
    %c0_2 = arith.constant 0 : index
    %1 = vector.load %arg2[%c0_1, %c0_2] : memref<32x16xf32, #tpu.memory_space<vmem>>, vector<32x16xf32>
    %cst = arith.constant dense<0.000000e+00> : vector<16x16xf32>
    %2 = tpu.matmul %0, %1, %cst {dimension_numbers = #tpu.dot_dimension_numbers<[1], [0], [0], [1], [0, 0, 1, 1], [], []>} : vector<16x32xf32>, vector<32x16xf32>, vector<16x16xf32> -> vector<16x16xf32>
    %c0_3 = arith.constant 0 : index
    %c0_4 = arith.constant 0 : index
    %3 = vector.load %arg3[%c0_3, %c0_4] : memref<16x16xf32, #tpu.memory_space<vmem>>, vector<16x16xf32>
    tpu.vector_store %arg3[%c0_3, %c0_4], %2 {strides = array<i32>} : memref<16x16xf32, #tpu.memory_space<vmem>>, vector<16x16xf32>,
    return
  }
  func.func @transform_0(%arg0: i32) -> (i32, i32) {
    %c0_i32 = arith.constant 0 : i32
    %c0_i32_0 = arith.constant 0 : i32
    return %arg0, %c0_i32 : i32, i32
  }
  func.func @transform_1(%arg0: i32) -> (i32, i32) {
    %c0_i32 = arith.constant 0 : i32
    %c0_i32_0 = arith.constant 0 : i32
    %c0_i32_1 = arith.constant 0 : i32
    return %c0_i32, %c0_i32_0 : i32, i32
  }
  func.func @transform_2(%arg0: i32) -> (i32, i32) {
    %c0_i32 = arith.constant 0 : i32
    %c0_i32_0 = arith.constant 0 : i32
    return %arg0, %c0_i32 : i32, i32
  }
}

</mosaic_0001>

<llo_original>
// kernel: tpu_custom_call.1
$region0: #{tpu_custom_call.1}
  #allocation0 [shape = 'u32[]', space=smem, size = 0x4, offset = 0x4, fixed_abs, tag = 'smem constant byte address 0x4 - core index']
  #allocation1 [shape = 'u32[144,128]{1,0:T(1,128)}', space=vmem, size = 0x12000, scoped, tag = 'internal scratch']
  %s0 = inlined_call_operand.vmem [shape: f32[16,32], index: 0, kind: input, shape index: {}]
  %s1 = inlined_call_operand.vmem [shape: f32[32,16], index: 1, kind: input, shape index: {}]
  %s2 = inlined_call_operand.hbm [shape: f32[16,16], index: 2, kind: output, shape index: {}]
  %s3 = sld [smem:[#allocation0]]
  $region18: #{tpu_custom_call.1} parent=0
    _
  %s5 = ssub.s32 1, %s3
  %s6 = scalar_select 0, %s5, %s3
  $region1: #{tpu_custom_call.1} parent=0
    #allocation2 [shape = 'u8[8192]{0}', space=vmem, size = 0x2000, scoped, tag = 'output window, operand 0, single buffered']
    #allocation3 [shape = 's32[1]{0}', space=sflag, size = 0x4, scoped, tag = 'scoped memory for tpu_custom_call.1']
    %7 = vsyncpa [#allocation3], 0
    // Predicated region
    $region2: #{tpu_custom_call.1} parent=1 // pred_check
      _
    $region3: #{tpu_custom_call.1} parent=1 // pred_check_branch
      %9 = sbr.rel (0) target = $region5
    $region4: #{tpu_custom_call.1} parent=1 // pred_region
      _
    $region5: #{tpu_custom_call.1} parent=1 // pred_fallthru
      _
    // Predicated region
    $region6: #{tpu_custom_call.1} parent=1 // pred_check
      _
    $region7: #{tpu_custom_call.1} parent=1 // pred_check_branch
      %11 = sbr.rel (0) target = $region9
    $region8: #{tpu_custom_call.1} parent=1 // pred_region
      _
    $region9: #{tpu_custom_call.1} parent=1 // pred_fallthru
      _
    %v12 = vld [vmem:[%s0] sm:$0xff]
    %v13 = vld [vmem:[%s0 + $0x8] sm:$0xff]
    %v14 = vld [vmem:[%s1] sm:$0xff]
    %v15 = vld [vmem:[%s1 + $0x8] sm:$0xff]
    %v16 = vld [vmem:[%s1 + $0x10] sm:$0xff]
    %v17 = vld [vmem:[%s1 + $0x18] sm:$0xff]
    %vm18 = vcmask 261120
    %v20 = vsel %vm18, %v12, 0
    %v23 = vsel %vm18, %v13, 0
    %25 = vmatprep.subr.mxu0 0.0
    %26 = vmatpush1.msra.mxu0 %v14
    %27 = vmatprep.subr.mxu0 0.0
    %28 = vmatpush1.msra.mxu0 %v15
    %29 = vmatprep.subr.mxu0 0.0
    %30 = vmatpush1.msra.mxu0 %v16
    %31 = vmatprep.subr.mxu0 0.0
    %32 = vmatpush1.msra.mxu0 %v17
    %33 = vmatprep.subr.mxu0 0.0
    %34 = vmatpush1.msra.mxu0 0.0
    %35 = vmatprep.subr.mxu0 0.0
    %36 = vmatpush1.msra.mxu0 0.0
    %37 = vmatprep.subr.mxu0 0.0
    %38 = vmatpush1.msra.mxu0 0.0
    %39 = vmatprep.subr.mxu0 0.0
    %40 = vmatpush1.msra.mxu0 0.0
    %41 = vmatprep.subr.mxu0 0.0
    %42 = vmatpush1.msra.mxu0 0.0
    %43 = vmatprep.subr.mxu0 0.0
    %44 = vmatpush1.msra.mxu0 0.0
    %45 = vmatprep.subr.mxu0 0.0
    %46 = vmatpush1.msra.mxu0 0.0
    %47 = vmatprep.subr.mxu0 0.0
    %48 = vmatpush1.msra.mxu0 0.0
    %49 = vmatprep.subr.mxu0 0.0
    %50 = vmatpush1.msra.mxu0 0.0
    %51 = vmatprep.subr.mxu0 0.0
    %52 = vmatpush1.msra.mxu0 0.0
    %53 = vmatprep.subr.mxu0 0.0
    %54 = vmatpush1.msra.mxu0 0.0
    %55 = vmatprep.subr.mxu0 0.0
    %56 = vmatpush1.msra.mxu0 0.0
    %57 = vmatprep.subr.mxu0 0.0
    %58 = vmatpush1.msra.mxu0 0.0
    %59 = vmatprep.subr.mxu0 0.0
    %60 = vmatpush1.msra.mxu0 0.0
    %61 = vmatprep.subr.mxu0 0.0
    %62 = vmatpush1.msra.mxu0 0.0
    %63 = vmatprep.subr.mxu0 0.0
    %64 = vmatpush1.msra.mxu0 0.0
    %65 = vmatprep.subr.mxu0 0.0
    %66 = vmatpush1.msra.mxu0 0.0
    %67 = vmatprep.subr.mxu0 0.0
    %68 = vmatpush1.msra.mxu0 0.0
    %69 = vmatprep.subr.mxu0 0.0
    %70 = vmatpush1.msra.mxu0 0.0
    %71 = vmatprep.subr.mxu0 0.0
    %72 = vmatpush1.msra.mxu0 0.0
    %73 = vmatprep.subr.mxu0 0.0
    %74 = vmatpush1.msra.mxu0 0.0
    %75 = vmatprep.subr.mxu0 0.0
    %76 = vmatpush1.msra.mxu0 0.0
    %77 = vmatprep.subr.mxu0 0.0
    %78 = vmatpush1.msra.mxu0 0.0
    %79 = vmatprep.subr.mxu0 0.0
    %80 = vmatpush1.msra.mxu0 0.0
    %81 = vmatprep.subr.mxu0 0.0
    %82 = vmatpush1.msra.mxu0 0.0
    %83 = vmatprep.subr.mxu0 0.0
    %84 = vmatpush1.msra.mxu0 0.0
    %85 = vmatprep.subr.mxu0 0.0
    %86 = vmatpush1.msra.mxu0 0.0
    %87 = vmatprep.subr.mxu0 0.0
    %88 = vmatpush1.msra.mxu0 0.0
    %89 = vmatprep.mubr.f32.mxu0 0.0
    %90 = vmatmul.mubr.f32.gmra.mrb[0].mxu0 %v20
    %v91 = vpop.f32.mrb[0].mxu0
    %v92 = vadd.f32 0.0, %v91
    %v93 = vpop.f32.mrb[0].mxu0
    %94 = vmatprep.mubr.f32.mxu0 0.0
    %95 = vmatmul.mubr.f32.gmra.mrb[0].mxu0 %v23
    %v96 = vpop.f32.mrb[0].mxu0
    %v97 = vadd.f32 0.0, %v96
    %v98 = vpop.f32.mrb[0].mxu0
    %99 = vdwg.mxu0
    %vm100 = vcmask 130048
    %101 = vst.msk [vmem:[#allocation2] sm:$0xff] %vm100, %v92
    %102 = vst.msk [vmem:[#allocation2 + $0x8] sm:$0xff] %vm100, %v97
    // Predicated region
    $region10: #{tpu_custom_call.1} parent=1 // pred_check
      _
    $region11: #{tpu_custom_call.1} parent=1 // pred_check_branch
      %104 = sbr.rel (0) target = $region13
    $region12: #{tpu_custom_call.1} parent=1 // pred_region
      %s106 = ssub.s32 256, 256
      %107 = vsyncadd [#allocation3], %s106
      %s108 = sshll.u32 [#allocation2], 4
      %s109 = int_to_ptr.vmem [resolvable:$true] %s108
      %114 = dma.vmem_to_hbm [thread:$0]  %s109, 256, %s2, [#allocation3], 128, 128, 8
    $region13: #{tpu_custom_call.1} parent=1 // pred_fallthru
      _
    // Predicated region
    $region14: #{tpu_custom_call.1} parent=1 // pred_check
      _
    $region15: #{tpu_custom_call.1} parent=1 // pred_check_branch
      %116 = sbr.rel (0) target = $region17
    $region16: #{tpu_custom_call.1} parent=1 // pred_region
      %117 = dma.done [#allocation3], 256
    $region17: #{tpu_custom_call.1} parent=1 // pred_fallthru
      _
    %118 = vsyncpa [#allocation3], 1

</llo_original>
